<compile_context>
chip_gen: v6e
topology: v6e:2x2x1
jax: 0.10.0
libtpu: 0.0.40
codegen_flags: <defaults>
</compile_context>

<pallas_src>
import functools

import jax
import jax.numpy as jnp
from jax.experimental import pallas as pl
from jax.experimental.pallas import tpu as pltpu


def _round_up(x, m):
    return ((x + m - 1) // m) * m


def _make_kernel(eps, fg_val, s_total, ts, need_row_mask):
    def kernel(pred_ref, tgt_ref, ovl_ref, out_ref):
        pred = pred_ref[...]            # (B, C, ts, 128), native dtype
        tgt = tgt_ref[...]              # (B, C, ts, 128), native dtype
        ovl = ovl_ref[...]              # (B, ts, 128),    native dtype

        # Valid-pixel mask from target channel 0 (torch: target > eps).
        valid = tgt[:, 0] > eps                                   # (B, ts, 128)

        if need_row_mask:
            # Ragged last block: rows >= s_total hold OOB-DMA garbage.  Only
            # emitted when S % ts != 0 (trace-time specialization).
            i = pl.program_id(0)
            row = jax.lax.broadcasted_iota(jnp.int32, (ts, 128), 0)
            valid = valid & ((i * ts + row) < s_total)[None]

        # NOTE: comparison happens in the overlap mask's native dtype (the
        # reference uses a float mask; bool/int masks would change semantics).
        is_fg = ovl == jnp.asarray(fg_val, dtype=ovl.dtype)       # (B, ts, 128)
        ovl_m = valid & is_fg                                     # (B, ts, 128)

        # |pred - target| summed over channels BEFORE masking (masks are
        # channel-independent); accumulate in f32.
        diff = jnp.abs(pred - tgt)                                # native dtype
        d_sum = jnp.sum(diff.astype(jnp.float32), axis=1)         # (B, ts, 128)

        # NaN-safe selects: OOB / padded garbage only ever sits in the data
        # operand of `where`, never multiplies in.
        d_valid = jnp.where(valid, d_sum, 0.0)
        d_ovl = jnp.where(ovl_m, d_sum, 0.0)

        def _partial(x):   # (B, ts, 128) -> (1, 128); wrapper finishes lanes.
            return jnp.sum(jnp.sum(x, axis=0), axis=0, keepdims=True)

        out_ref[:, 0:1, :] = _partial(d_valid)[None]                    # S1
        out_ref[:, 1:2, :] = _partial(valid.astype(jnp.float32))[None]  # N1
        out_ref[:, 2:3, :] = _partial(d_ovl)[None]                      # S2
        out_ref[:, 3:4, :] = _partial(ovl_m.astype(jnp.float32))[None]  # N2

    return kernel


@functools.partial(
    jax.jit,
    static_argnames=("loss_weight", "overlap_loss_weight", "eps",
                     "overlap_foreground_val", "tile_bytes"),
)
def stereo_pointmap_l1_loss(pred, target, overlap_valid_mask, *,
                            loss_weight=1.0, overlap_loss_weight=10.0,
                            eps=-100.0, overlap_foreground_val=100.0,
                            tile_bytes=4 * 1024 * 1024):
    assert pred.shape == target.shape
    B, C, H, W = pred.shape
    N = H * W
    pad = (-N) % 128

    if pad:
        # One-time pad so the spatial axis splits into dense (S, 128) rows.
        # Target pads with `eps` (fails `> eps`), so padded pixels are never
        # valid; overlap pads with 0 and is gated by `valid` anyway.
        pred_f = jnp.pad(pred.reshape(B, C, N), ((0, 0), (0, 0), (0, pad)))
        tgt_f = jnp.pad(target.reshape(B, C, N), ((0, 0), (0, 0), (0, pad)),
                        constant_values=float(eps))
        ovl_f = jnp.pad(overlap_valid_mask.reshape(B, N), ((0, 0), (0, pad)))
    else:
        pred_f, tgt_f, ovl_f = pred, target, overlap_valid_mask

    Np = N + pad
    S = Np // 128
    pred_f = pred_f.reshape(B, C, S, 128)
    tgt_f = tgt_f.reshape(B, C, S, 128)
    ovl_f = ovl_f.reshape(B, S, 128)

    # ---- tile selection: rows of 128 lanes per grid step -------------------
    itemsize = jnp.dtype(pred.dtype).itemsize
    ovl_itemsize = jnp.dtype(overlap_valid_mask.dtype).itemsize
    row_bytes = 2 * B * C * 128 * itemsize + B * 128 * ovl_itemsize
    ts = max(8, (max(1, int(tile_bytes) // row_bytes) // 8) * 8)
    S8 = _round_up(S, 8)
    ts = min(ts, S8)
    if S8 >= 32:
        # Keep >= 4 blocks so v7x's two TensorCores both get work on the
        # single "parallel" grid axis.
        ts = min(ts, max(8, (pl.cdiv(S8, 4) // 8) * 8))
    num_blocks = pl.cdiv(S, ts)
    need_row_mask = (S % ts) != 0

    kernel = _make_kernel(float(eps), float(overlap_foreground_val),
                          S, ts, need_row_mask)

    partials = pl.pallas_call(
        kernel,
        out_shape=jax.ShapeDtypeStruct((num_blocks, 4, 128), jnp.float32),
        grid_spec=pltpu.PrefetchScalarGridSpec(
            num_scalar_prefetch=0,
            grid=(num_blocks,),
            in_specs=[
                pl.BlockSpec((B, C, ts, 128), lambda i: (0, 0, i, 0)),
                pl.BlockSpec((B, C, ts, 128), lambda i: (0, 0, i, 0)),
                pl.BlockSpec((B, ts, 128), lambda i: (0, i, 0)),
            ],
            out_specs=pl.BlockSpec((1, 4, 128), lambda i: (i, 0, 0)),
        ),
        compiler_params=pltpu.CompilerParams(
            # Independent per-block partials -> shardable across TensorCores.
            dimension_semantics=("parallel",),
            vmem_limit_bytes=32 * 1024 * 1024),
    )(pred_f, tgt_f, ovl_f)

    sums = jnp.sum(partials, axis=(0, 2))       # (4,) = S1, N1, S2, N2
    s1, n1, s2, n2 = sums[0], sums[1], sums[2], sums[3]
    main = s1 / jnp.maximum(n1, 1.0) * loss_weight
    over = s2 / jnp.maximum(n2, 1.0) * overlap_loss_weight
    return main + over


def _reference(pred, target, overlap_valid_mask, *, loss_weight=1.0,
               overlap_loss_weight=10.0, eps=-100.0,
               overlap_foreground_val=100.0):
    """Plain-JAX port of the PyTorch forward (defaults, normalize=False)."""
    pred = pred.astype(jnp.float32)
    target = target.astype(jnp.float32)
    valid = (target > eps).astype(jnp.float32)[:, 0:1, :, :]      # (B,1,H,W)
    l1 = jnp.abs(pred - target) * valid                           # (B,C,H,W)
    main = l1.sum() / jnp.maximum(valid.sum(), 1.0) * loss_weight
    ovl = (overlap_valid_mask == overlap_foreground_val).astype(jnp.float32)
    ovl = valid * ovl[:, None, :, :]
    over = (jnp.abs(pred - target) * ovl).sum() / jnp.maximum(ovl.sum(), 1.0)
    return main + over * overlap_loss_weight


def _make_inputs(key, B, C, H, W):
    k1, k2, k3, k4 = jax.random.split(key, 4)
    pred = jax.random.normal(k1, (B, C, H, W), dtype=jnp.float32)
    target = jax.random.normal(k2, (B, C, H, W), dtype=jnp.float32)
    # Make ~20% of pixels invalid (channel 0 far below eps threshold).
    invalid = jax.random.bernoulli(k3, 0.2, (B, 1, H, W))
    target = jnp.where(invalid & (jnp.arange(C)[None, :, None, None] == 0),
                       jnp.float32(-1000.0), target)
    # Overlap mask: foreground value 100 on ~half the pixels, 0 elsewhere.
    overlap = jnp.where(jax.random.bernoulli(k4, 0.5, (B, H, W)),
                        jnp.float32(100.0), jnp.float32(0.0))
    return pred, target, overlap


if __name__ == "__main__":
    key = jax.random.PRNGKey(0)
    k_a, k_b, k_c = jax.random.split(key, 3)

    # Case 1: H*W multiple of 128; single block with a ragged row tail
    # (S=2 < ts=8) -> exercises the in-kernel row mask.
    pred, target, overlap = _make_inputs(k_a, 2, 3, 16, 16)
    loss = jax.block_until_ready(stereo_pointmap_l1_loss(pred, target, overlap))
    ref = _reference(pred, target, overlap)
    assert jnp.allclose(loss, ref, rtol=1e-5, atol=1e-5), (loss, ref)

    # Case 2: H*W = 255 (not a multiple of 128) exercises the one-time pad.
    pred2, target2, overlap2 = _make_inputs(k_b, 2, 3, 15, 17)
    loss2 = jax.block_until_ready(
        stereo_pointmap_l1_loss(pred2, target2, overlap2))
    ref2 = _reference(pred2, target2, overlap2)
    assert jnp.allclose(loss2, ref2, rtol=1e-5, atol=1e-5), (loss2, ref2)

    # Case 3: multi-block ragged grid (S=18, ts forced to 8 -> 3 blocks; the
    # last block's OOB garbage rows must be masked, no shifted/double counts).
    pred3, target3, overlap3 = _make_inputs(k_c, 2, 3, 48, 48)
    loss3 = jax.block_until_ready(
        stereo_pointmap_l1_loss(pred3, target3, overlap3, tile_bytes=1))
    ref3 = _reference(pred3, target3, overlap3)
    assert jnp.allclose(loss3, ref3, rtol=1e-5, atol=1e-5), (loss3, ref3)

    print("KERNEL_OK")
</pallas_src>

<mosaic_0001>
module attributes {stable_mosaic.version = 11 : i64} {
  func.func @kernel(%arg0: i32, %arg1: memref<2x3x8x128xf32, #tpu.memory_space<vmem>>, %arg2: memref<2x3x8x128xf32, #tpu.memory_space<vmem>>, %arg3: memref<2x8x128xf32, #tpu.memory_space<vmem>>, %arg4: memref<1x4x128xf32, #tpu.memory_space<vmem>>) attributes {dimension_semantics = [#tpu.dimension_semantics<parallel>], iteration_bounds = array<i64: 1>, scalar_prefetch = 0 : i64, scratch_operands = 0 : i64, tpu.core_type = #tpu.core_type<tc>, window_params = [{transform_indices = @transform_0, window_bounds = array<i64: 2, 3, 8, 128>}, {transform_indices = @transform_1, window_bounds = array<i64: 2, 3, 8, 128>}, {transform_indices = @transform_2, window_bounds = array<i64: 2, 8, 128>}, {transform_indices = @transform_3, window_bounds = array<i64: 1, 4, 128>}]} {
    %c0 = arith.constant 0 : index
    %c0_0 = arith.constant 0 : index
    %c0_1 = arith.constant 0 : index
    %c0_2 = arith.constant 0 : index
    %0 = vector.load %arg1[%c0, %c0_0, %c0_1, %c0_2] : memref<2x3x8x128xf32, #tpu.memory_space<vmem>>, vector<2x3x8x128xf32>
    %c0_3 = arith.constant 0 : index
    %c0_4 = arith.constant 0 : index
    %c0_5 = arith.constant 0 : index
    %c0_6 = arith.constant 0 : index
    %1 = vector.load %arg2[%c0_3, %c0_4, %c0_5, %c0_6] : memref<2x3x8x128xf32, #tpu.memory_space<vmem>>, vector<2x3x8x128xf32>
    %c0_7 = arith.constant 0 : index
    %c0_8 = arith.constant 0 : index
    %c0_9 = arith.constant 0 : index
    %2 = vector.load %arg3[%c0_7, %c0_8, %c0_9] : memref<2x8x128xf32, #tpu.memory_space<vmem>>, vector<2x8x128xf32>
    %3 = vector.extract_strided_slice %1 {offsets = [0, 0, 0, 0], sizes = [2, 1, 8, 128], strides = [1, 1, 1, 1]} : vector<2x3x8x128xf32> to vector<2x1x8x128xf32>
    %4 = vector.shape_cast %3 : vector<2x1x8x128xf32> to vector<2x8x128xf32>
    %cst = arith.constant -1.000000e+02 : f32
    %5 = vector.broadcast %cst : f32 to vector<2x8x128xf32>
    %6 = arith.cmpf ogt, %4, %5 : vector<2x8x128xf32>
    %7 = tpu.iota {dimensions = array<i32: 0>} : vector<8x128xi32>
    %c8_i32 = arith.constant 8 : i32
    %8 = arith.muli %arg0, %c8_i32 : i32
    %9 = vector.broadcast %8 : i32 to vector<8x128xi32>
    %10 = arith.addi %9, %7 : vector<8x128xi32>
    %c2_i32 = arith.constant 2 : i32
    %11 = vector.broadcast %c2_i32 : i32 to vector<8x128xi32>
    %12 = arith.cmpi slt, %10, %11 : vector<8x128xi32>
    %13 = vector.shape_cast %12 : vector<8x128xi1> to vector<1x8x128xi1>
    %14 = vector.broadcast %13 : vector<1x8x128xi1> to vector<2x8x128xi1>
    %15 = arith.andi %6, %14 : vector<2x8x128xi1>
    %cst_10 = arith.constant 1.000000e+02 : f32
    %16 = vector.broadcast %cst_10 : f32 to vector<2x8x128xf32>
    %17 = arith.cmpf oeq, %2, %16 : vector<2x8x128xf32>
    %18 = arith.andi %15, %17 : vector<2x8x128xi1>
    %19 = arith.subf %0, %1 : vector<2x3x8x128xf32>
    %20 = math.absf %19 : vector<2x3x8x128xf32>
    %cst_11 = arith.constant dense<0.000000e+00> : vector<2x8x128xf32>
    %21 = vector.multi_reduction <add>, %20, %cst_11 [1] : vector<2x3x8x128xf32> to vector<2x8x128xf32>
    %cst_12 = arith.constant 0.000000e+00 : f32
    %22 = vector.broadcast %cst_12 : f32 to vector<2x8x128xf32>
    %23 = arith.select %15, %21, %22 : vector<2x8x128xi1>, vector<2x8x128xf32>
    %cst_13 = arith.constant 0.000000e+00 : f32
    %24 = vector.broadcast %cst_13 : f32 to vector<2x8x128xf32>
    %25 = arith.select %18, %21, %24 : vector<2x8x128xi1>, vector<2x8x128xf32>
    %cst_14 = arith.constant dense<0.000000e+00> : vector<8x128xf32>
    %26 = vector.multi_reduction <add>, %23, %cst_14 [0] : vector<2x8x128xf32> to vector<8x128xf32>
    %cst_15 = arith.constant dense<0.000000e+00> : vector<128xf32>
    %27 = vector.multi_reduction <add>, %26, %cst_15 [0] : vector<8x128xf32> to vector<128xf32>
    %28 = vector.shape_cast %27 : vector<128xf32> to vector<1x128xf32>
    %29 = vector.shape_cast %28 : vector<1x128xf32> to vector<1x1x128xf32>
    %c0_16 = arith.constant 0 : index
    %c0_17 = arith.constant 0 : index
    %c0_18 = arith.constant 0 : index
    %30 = vector.load %arg4[%c0_16, %c0_17, %c0_18] : memref<1x4x128xf32, #tpu.memory_space<vmem>>, vector<1x1x128xf32>
    tpu.vector_store %arg4[%c0_16, %c0_17, %c0_18], %29 {strides = array<i32>} : memref<1x4x128xf32, #tpu.memory_space<vmem>>, vector<1x1x128xf32>,
    %31 = arith.extui %15 : vector<2x8x128xi1> to vector<2x8x128xi32>
    %32 = arith.sitofp %31 : vector<2x8x128xi32> to vector<2x8x128xf32>
    %cst_19 = arith.constant dense<0.000000e+00> : vector<8x128xf32>
    %33 = vector.multi_reduction <add>, %32, %cst_19 [0] : vector<2x8x128xf32> to vector<8x128xf32>
    %cst_20 = arith.constant dense<0.000000e+00> : vector<128xf32>
    %34 = vector.multi_reduction <add>, %33, %cst_20 [0] : vector<8x128xf32> to vector<128xf32>
    %35 = vector.shape_cast %34 : vector<128xf32> to vector<1x128xf32>
    %36 = vector.shape_cast %35 : vector<1x128xf32> to vector<1x1x128xf32>
    %c0_21 = arith.constant 0 : index
    %c1 = arith.constant 1 : index
    %c0_22 = arith.constant 0 : index
    %37 = vector.load %arg4[%c0_21, %c1, %c0_22] : memref<1x4x128xf32, #tpu.memory_space<vmem>>, vector<1x1x128xf32>
    tpu.vector_store %arg4[%c0_21, %c1, %c0_22], %36 {strides = array<i32>} : memref<1x4x128xf32, #tpu.memory_space<vmem>>, vector<1x1x128xf32>,
    %cst_23 = arith.constant dense<0.000000e+00> : vector<8x128xf32>
    %38 = vector.multi_reduction <add>, %25, %cst_23 [0] : vector<2x8x128xf32> to vector<8x128xf32>
    %cst_24 = arith.constant dense<0.000000e+00> : vector<128xf32>
    %39 = vector.multi_reduction <add>, %38, %cst_24 [0] : vector<8x128xf32> to vector<128xf32>
    %40 = vector.shape_cast %39 : vector<128xf32> to vector<1x128xf32>
    %41 = vector.shape_cast %40 : vector<1x128xf32> to vector<1x1x128xf32>
    %c0_25 = arith.constant 0 : index
    %c2 = arith.constant 2 : index
    %c0_26 = arith.constant 0 : index
    %42 = vector.load %arg4[%c0_25, %c2, %c0_26] : memref<1x4x128xf32, #tpu.memory_space<vmem>>, vector<1x1x128xf32>
    tpu.vector_store %arg4[%c0_25, %c2, %c0_26], %41 {strides = array<i32>} : memref<1x4x128xf32, #tpu.memory_space<vmem>>, vector<1x1x128xf32>,
    %43 = arith.extui %18 : vector<2x8x128xi1> to vector<2x8x128xi32>
    %44 = arith.sitofp %43 : vector<2x8x128xi32> to vector<2x8x128xf32>
    %cst_27 = arith.constant dense<0.000000e+00> : vector<8x128xf32>
    %45 = vector.multi_reduction <add>, %44, %cst_27 [0] : vector<2x8x128xf32> to vector<8x128xf32>
    %cst_28 = arith.constant dense<0.000000e+00> : vector<128xf32>
    %46 = vector.multi_reduction <add>, %45, %cst_28 [0] : vector<8x128xf32> to vector<128xf32>
    %47 = vector.shape_cast %46 : vector<128xf32> to vector<1x128xf32>
    %48 = vector.shape_cast %47 : vector<1x128xf32> to vector<1x1x128xf32>
    %c0_29 = arith.constant 0 : index
    %c3 = arith.constant 3 : index
    %c0_30 = arith.constant 0 : index
    %49 = vector.load %arg4[%c0_29, %c3, %c0_30] : memref<1x4x128xf32, #tpu.memory_space<vmem>>, vector<1x1x128xf32>
    tpu.vector_store %arg4[%c0_29, %c3, %c0_30], %48 {strides = array<i32>} : memref<1x4x128xf32, #tpu.memory_space<vmem>>, vector<1x1x128xf32>,
    return
  }
  func.func @transform_0(%arg0: i32) -> (i32, i32, i32, i32) {
    %c0_i32 = arith.constant 0 : i32
    %c0_i32_0 = arith.constant 0 : i32
    %c0_i32_1 = arith.constant 0 : i32
    %c0_i32_2 = arith.constant 0 : i32
    return %c0_i32, %c0_i32_0, %arg0, %c0_i32_1 : i32, i32, i32, i32
  }
  func.func @transform_1(%arg0: i32) -> (i32, i32, i32, i32) {
    %c0_i32 = arith.constant 0 : i32
    %c0_i32_0 = arith.constant 0 : i32
    %c0_i32_1 = arith.constant 0 : i32
    %c0_i32_2 = arith.constant 0 : i32
    return %c0_i32, %c0_i32_0, %arg0, %c0_i32_1 : i32, i32, i32, i32
  }
  func.func @transform_2(%arg0: i32) -> (i32, i32, i32) {
    %c0_i32 = arith.constant 0 : i32
    %c0_i32_0 = arith.constant 0 : i32
    %c0_i32_1 = arith.constant 0 : i32
    return %c0_i32, %arg0, %c0_i32_0 : i32, i32, i32
  }
  func.func @transform_3(%arg0: i32) -> (i32, i32, i32) {
    %c0_i32 = arith.constant 0 : i32
    %c0_i32_0 = arith.constant 0 : i32
    %c0_i32_1 = arith.constant 0 : i32
    return %arg0, %c0_i32, %c0_i32_0 : i32, i32, i32
  }
}

</mosaic_0001>

<llo_original>
// kernel: stereo_pointmap_l1_loss.1
$region0: #{stereo_pointmap_l1_loss.1}
  #allocation0 [shape = 'u32[]', space=smem, size = 0x4, offset = 0x4, fixed_abs, tag = 'smem constant byte address 0x4 - core index']
  #allocation1 [shape = 'u32[144,128]{1,0:T(1,128)}', space=vmem, size = 0x12000, scoped, tag = 'internal scratch']
  %s0 = inlined_call_operand.vmem [shape: f32[2,3,2,128], index: 0, kind: input, shape index: {}]
  %s1 = inlined_call_operand.vmem [shape: f32[2,3,2,128], index: 1, kind: input, shape index: {}]
  %s2 = inlined_call_operand.vmem [shape: f32[2,2,128], index: 2, kind: input, shape index: {}]
  %s3 = inlined_call_operand.vmem [shape: f32[1,4,128], index: 3, kind: output, shape index: {}]
  %s4 = sld [smem:[#allocation0]]
  $region138: #{stereo_pointmap_l1_loss.1} parent=0
    _
  %s6 = ssub.s32 1, %s4
  %s7 = scalar_select 0, %s6, %s4
  $region1: #{stereo_pointmap_l1_loss.1} parent=0
    #allocation2 [shape = 'u8[24576]{0}', space=vmem, size = 0x6000, scoped, tag = 'input window, operand 0, single buffered']
    #allocation3 [shape = 'u8[24576]{0}', space=vmem, size = 0x6000, scoped, tag = 'input window, operand 1, single buffered']
    #allocation4 [shape = 'u8[8192]{0}', space=vmem, size = 0x2000, scoped, tag = 'input window, operand 2, single buffered']
    // Predicated region
    $region2: #{stereo_pointmap_l1_loss.1} parent=1 // pred_check
      _
    $region3: #{stereo_pointmap_l1_loss.1} parent=1 // pred_check_branch
      %9 = sbr.rel (0) target = $region5
    $region4: #{stereo_pointmap_l1_loss.1} parent=1 // pred_region
      // Predicated region
      $region6: #{stereo_pointmap_l1_loss.1} parent=4 // pred_check
        _
      $region7: #{stereo_pointmap_l1_loss.1} parent=4 // pred_check_branch
        %11 = sbr.rel (0) target = $region9
      $region8: #{stereo_pointmap_l1_loss.1} parent=4 // pred_region
        // Predicated region
        $region10: #{stereo_pointmap_l1_loss.1} parent=8 // pred_check
          _
        $region11: #{stereo_pointmap_l1_loss.1} parent=8 // pred_check_branch
          %13 = sbr.rel target = $region13
        $region12: #{stereo_pointmap_l1_loss.1} parent=8 // pred_region
          // Predicated region
          $region25: #{stereo_pointmap_l1_loss.1} parent=12 // pred_check
            _
          $region26: #{stereo_pointmap_l1_loss.1} parent=12 // pred_check_branch
            %39 = sbr.rel (0) target = $region28
          $region27: #{stereo_pointmap_l1_loss.1} parent=12 // pred_region
            loop: start=0, step=1, limit=1
            $region29: #{stereo_pointmap_l1_loss.1} parent=27 // loop_pre_header
              _
            $region30: #{stereo_pointmap_l1_loss.1} parent=27 // loop_header
              %s41 = sphi 0, %s45
              %p42 = scmp.ge.s32.totalorder %s41, 1
              %s46 = sphi %s0, %s0
              %s47 = sphi [#allocation2], [#allocation2]
            $region31: #{stereo_pointmap_l1_loss.1} parent=27 // loop_header_branch
              %44 = sbr.rel (%p42) target = $region35
            $region32: #{stereo_pointmap_l1_loss.1} parent=27 // loop_body
              _
            $region33: #{stereo_pointmap_l1_loss.1} parent=27 // loop_footer
              %s45 = sadd.s32 1, %s41
            $region34: #{stereo_pointmap_l1_loss.1} parent=27 // loop_footer_branch
              %40 = sbr.rel target = $region30
            $region35: #{stereo_pointmap_l1_loss.1} parent=27 // loop_exit
              _
            %s49 = ssub.s32 4, 1
            loop: start=0, step=1, limit=1
            $region36: #{stereo_pointmap_l1_loss.1} parent=27 // loop_pre_header
              _
            $region37: #{stereo_pointmap_l1_loss.1} parent=27 // loop_header
              %s51 = sphi 0, %s55
              %p52 = scmp.ge.s32.totalorder %s51, 1
              %s56 = sphi %s0, %s0
              %s57 = sphi [#allocation2], [#allocation2]
            $region38: #{stereo_pointmap_l1_loss.1} parent=27 // loop_header_branch
              %54 = sbr.rel (%p52) target = $region42
            $region39: #{stereo_pointmap_l1_loss.1} parent=27 // loop_body
              %v58 = vld [vmem:[%s56] sm:%s49]
              %59 = vst [vmem:[%s57] sm:%s49] %v58
              %v60 = vld [vmem:[%s56 + $0x2] sm:%s49]
              %61 = vst [vmem:[%s57 + $0x8] sm:%s49] %v60
              %v62 = vld [vmem:[%s56 + $0x4] sm:%s49]
              %63 = vst [vmem:[%s57 + $0x10] sm:%s49] %v62
              %v64 = vld [vmem:[%s56 + $0x6] sm:%s49]
              %65 = vst [vmem:[%s57 + $0x18] sm:%s49] %v64
              %v66 = vld [vmem:[%s56 + $0x8] sm:%s49]
              %67 = vst [vmem:[%s57 + $0x20] sm:%s49] %v66
              %v68 = vld [vmem:[%s56 + $0xa] sm:%s49]
              %69 = vst [vmem:[%s57 + $0x28] sm:%s49] %v68
            $region40: #{stereo_pointmap_l1_loss.1} parent=27 // loop_footer
              %s55 = sadd.s32 1, %s51
            $region41: #{stereo_pointmap_l1_loss.1} parent=27 // loop_footer_branch
              %50 = sbr.rel target = $region37
            $region42: #{stereo_pointmap_l1_loss.1} parent=27 // loop_exit
              _
          $region28: #{stereo_pointmap_l1_loss.1} parent=12 // pred_fallthru
            _
        $region13: #{stereo_pointmap_l1_loss.1} parent=8 // pred_fallthru
          _
        // Predicated region
        $region14: #{stereo_pointmap_l1_loss.1} parent=8 // pred_check
          _
        $region15: #{stereo_pointmap_l1_loss.1} parent=8 // pred_check_branch
          %15 = sbr.rel (0) target = $region17
        $region16: #{stereo_pointmap_l1_loss.1} parent=8 // pred_region
          %s17 = ssub.s32 4, 1
          loop: start=0, step=1, limit=1
          $region18: #{stereo_pointmap_l1_loss.1} parent=16 // loop_pre_header
            _
          $region19: #{stereo_pointmap_l1_loss.1} parent=16 // loop_header
            %s19 = sphi 0, %s23
            %p20 = scmp.ge.s32.totalorder %s19, 1
            %s24 = sphi %s0, %s0
            %s25 = sphi [#allocation2], [#allocation2]
          $region20: #{stereo_pointmap_l1_loss.1} parent=16 // loop_header_branch
            %22 = sbr.rel (%p20) target = $region24
          $region21: #{stereo_pointmap_l1_loss.1} parent=16 // loop_body
            %v26 = vld [vmem:[%s24] sm:%s17]
            %27 = vst [vmem:[%s25] sm:%s17] %v26
            %v28 = vld [vmem:[%s24 + $0x2] sm:%s17]
            %29 = vst [vmem:[%s25 + $0x8] sm:%s17] %v28
            %v30 = vld [vmem:[%s24 + $0x4] sm:%s17]
            %31 = vst [vmem:[%s25 + $0x10] sm:%s17] %v30
            %v32 = vld [vmem:[%s24 + $0x6] sm:%s17]
            %33 = vst [vmem:[%s25 + $0x18] sm:%s17] %v32
            %v34 = vld [vmem:[%s24 + $0x8] sm:%s17]
            %35 = vst [vmem:[%s25 + $0x20] sm:%s17] %v34
            %v36 = vld [vmem:[%s24 + $0xa] sm:%s17]
            %37 = vst [vmem:[%s25 + $0x28] sm:%s17] %v36
          $region22: #{stereo_pointmap_l1_loss.1} parent=16 // loop_footer
            %s23 = sadd.s32 1, %s19
          $region23: #{stereo_pointmap_l1_loss.1} parent=16 // loop_footer_branch
            %18 = sbr.rel target = $region19
          $region24: #{stereo_pointmap_l1_loss.1} parent=16 // loop_exit
            _
        $region17: #{stereo_pointmap_l1_loss.1} parent=8 // pred_fallthru
          _
      $region9: #{stereo_pointmap_l1_loss.1} parent=4 // pred_fallthru
        _
      %70 = vnop
    $region5: #{stereo_pointmap_l1_loss.1} parent=1 // pred_fallthru
      _
    // Predicated region
    $region43: #{stereo_pointmap_l1_loss.1} parent=1 // pred_check
      _
    $region44: #{stereo_pointmap_l1_loss.1} parent=1 // pred_check_branch
      %72 = sbr.rel (0) target = $region46
    $region45: #{stereo_pointmap_l1_loss.1} parent=1 // pred_region
      // Predicated region
      $region47: #{stereo_pointmap_l1_loss.1} parent=45 // pred_check
        _
      $region48: #{stereo_pointmap_l1_loss.1} parent=45 // pred_check_branch
        %74 = sbr.rel (0) target = $region50
      $region49: #{stereo_pointmap_l1_loss.1} parent=45 // pred_region
        // Predicated region
        $region51: #{stereo_pointmap_l1_loss.1} parent=49 // pred_check
          _
        $region52: #{stereo_pointmap_l1_loss.1} parent=49 // pred_check_branch
          %76 = sbr.rel target = $region54
        $region53: #{stereo_pointmap_l1_loss.1} parent=49 // pred_region
          // Predicated region
          $region66: #{stereo_pointmap_l1_loss.1} parent=53 // pred_check
            _
          $region67: #{stereo_pointmap_l1_loss.1} parent=53 // pred_check_branch
            %102 = sbr.rel (0) target = $region69
          $region68: #{stereo_pointmap_l1_loss.1} parent=53 // pred_region
            loop: start=0, step=1, limit=1
            $region70: #{stereo_pointmap_l1_loss.1} parent=68 // loop_pre_header
              _
            $region71: #{stereo_pointmap_l1_loss.1} parent=68 // loop_header
              %s104 = sphi 0, %s108
              %p105 = scmp.ge.s32.totalorder %s104, 1
              %s109 = sphi %s1, %s1
              %s110 = sphi [#allocation3], [#allocation3]
            $region72: #{stereo_pointmap_l1_loss.1} parent=68 // loop_header_branch
              %107 = sbr.rel (%p105) target = $region76
            $region73: #{stereo_pointmap_l1_loss.1} parent=68 // loop_body
              _
            $region74: #{stereo_pointmap_l1_loss.1} parent=68 // loop_footer
              %s108 = sadd.s32 1, %s104
            $region75: #{stereo_pointmap_l1_loss.1} parent=68 // loop_footer_branch
              %103 = sbr.rel target = $region71
            $region76: #{stereo_pointmap_l1_loss.1} parent=68 // loop_exit
              _
            %s112 = ssub.s32 4, 1
            loop: start=0, step=1, limit=1
            $region77: #{stereo_pointmap_l1_loss.1} parent=68 // loop_pre_header
              _
            $region78: #{stereo_pointmap_l1_loss.1} parent=68 // loop_header
              %s114 = sphi 0, %s118
              %p115 = scmp.ge.s32.totalorder %s114, 1
              %s119 = sphi %s1, %s1
              %s120 = sphi [#allocation3], [#allocation3]
            $region79: #{stereo_pointmap_l1_loss.1} parent=68 // loop_header_branch
              %117 = sbr.rel (%p115) target = $region83
            $region80: #{stereo_pointmap_l1_loss.1} parent=68 // loop_body
              %v121 = vld [vmem:[%s119] sm:%s112]
              %122 = vst [vmem:[%s120] sm:%s112] %v121
              %v123 = vld [vmem:[%s119 + $0x2] sm:%s112]
              %124 = vst [vmem:[%s120 + $0x8] sm:%s112] %v123
              %v125 = vld [vmem:[%s119 + $0x4] sm:%s112]
              %126 = vst [vmem:[%s120 + $0x10] sm:%s112] %v125
              %v127 = vld [vmem:[%s119 + $0x6] sm:%s112]
              %128 = vst [vmem:[%s120 + $0x18] sm:%s112] %v127
              %v129 = vld [vmem:[%s119 + $0x8] sm:%s112]
              %130 = vst [vmem:[%s120 + $0x20] sm:%s112] %v129
              %v131 = vld [vmem:[%s119 + $0xa] sm:%s112]
              %132 = vst [vmem:[%s120 + $0x28] sm:%s112] %v131
            $region81: #{stereo_pointmap_l1_loss.1} parent=68 // loop_footer
              %s118 = sadd.s32 1, %s114
            $region82: #{stereo_pointmap_l1_loss.1} parent=68 // loop_footer_branch
              %113 = sbr.rel target = $region78
            $region83: #{stereo_pointmap_l1_loss.1} parent=68 // loop_exit
              _
          $region69: #{stereo_pointmap_l1_loss.1} parent=53 // pred_fallthru
            _
        $region54: #{stereo_pointmap_l1_loss.1} parent=49 // pred_fallthru
          _
        // Predicated region
        $region55: #{stereo_pointmap_l1_loss.1} parent=49 // pred_check
          _
        $region56: #{stereo_pointmap_l1_loss.1} parent=49 // pred_check_branch
          %78 = sbr.rel (0) target = $region58
        $region57: #{stereo_pointmap_l1_loss.1} parent=49 // pred_region
          %s80 = ssub.s32 4, 1
          loop: start=0, step=1, limit=1
          $region59: #{stereo_pointmap_l1_loss.1} parent=57 // loop_pre_header
            _
          $region60: #{stereo_pointmap_l1_loss.1} parent=57 // loop_header
            %s82 = sphi 0, %s86
            %p83 = scmp.ge.s32.totalorder %s82, 1
            %s87 = sphi %s1, %s1
            %s88 = sphi [#allocation3], [#allocation3]
          $region61: #{stereo_pointmap_l1_loss.1} parent=57 // loop_header_branch
            %85 = sbr.rel (%p83) target = $region65
          $region62: #{stereo_pointmap_l1_loss.1} parent=57 // loop_body
            %v89 = vld [vmem:[%s87] sm:%s80]
            %90 = vst [vmem:[%s88] sm:%s80] %v89
            %v91 = vld [vmem:[%s87 + $0x2] sm:%s80]
            %92 = vst [vmem:[%s88 + $0x8] sm:%s80] %v91
            %v93 = vld [vmem:[%s87 + $0x4] sm:%s80]
            %94 = vst [vmem:[%s88 + $0x10] sm:%s80] %v93
            %v95 = vld [vmem:[%s87 + $0x6] sm:%s80]
            %96 = vst [vmem:[%s88 + $0x18] sm:%s80] %v95
            %v97 = vld [vmem:[%s87 + $0x8] sm:%s80]
            %98 = vst [vmem:[%s88 + $0x20] sm:%s80] %v97
            %v99 = vld [vmem:[%s87 + $0xa] sm:%s80]
            %100 = vst [vmem:[%s88 + $0x28] sm:%s80] %v99
          $region63: #{stereo_pointmap_l1_loss.1} parent=57 // loop_footer
            %s86 = sadd.s32 1, %s82
          $region64: #{stereo_pointmap_l1_loss.1} parent=57 // loop_footer_branch
            %81 = sbr.rel target = $region60
          $region65: #{stereo_pointmap_l1_loss.1} parent=57 // loop_exit
            _
        $region58: #{stereo_pointmap_l1_loss.1} parent=49 // pred_fallthru
          _
      $region50: #{stereo_pointmap_l1_loss.1} parent=45 // pred_fallthru
        _
      %133 = vnop
    $region46: #{stereo_pointmap_l1_loss.1} parent=1 // pred_fallthru
      _
    // Predicated region
    $region84: #{stereo_pointmap_l1_loss.1} parent=1 // pred_check
      _
    $region85: #{stereo_pointmap_l1_loss.1} parent=1 // pred_check_branch
      %135 = sbr.rel (0) target = $region87
    $region86: #{stereo_pointmap_l1_loss.1} parent=1 // pred_region
      // Predicated region
      $region88: #{stereo_pointmap_l1_loss.1} parent=86 // pred_check
        _
      $region89: #{stereo_pointmap_l1_loss.1} parent=86 // pred_check_branch
        %137 = sbr.rel (0) target = $region91
      $region90: #{stereo_pointmap_l1_loss.1} parent=86 // pred_region
        // Predicated region
        $region92: #{stereo_pointmap_l1_loss.1} parent=90 // pred_check
          _
        $region93: #{stereo_pointmap_l1_loss.1} parent=90 // pred_check_branch
          %139 = sbr.rel target = $region95
        $region94: #{stereo_pointmap_l1_loss.1} parent=90 // pred_region
          // Predicated region
          $region107: #{stereo_pointmap_l1_loss.1} parent=94 // pred_check
            _
          $region108: #{stereo_pointmap_l1_loss.1} parent=94 // pred_check_branch
            %157 = sbr.rel (0) target = $region110
          $region109: #{stereo_pointmap_l1_loss.1} parent=94 // pred_region
            %s159 = ssub.s32 4, 1
            loop: start=0, step=1, limit=1
            $region111: #{stereo_pointmap_l1_loss.1} parent=109 // loop_pre_header
              _
            $region112: #{stereo_pointmap_l1_loss.1} parent=109 // loop_header
              %s161 = sphi 0, %s165
              %p162 = scmp.ge.s32.totalorder %s161, 1
              %s166 = sphi %s2, %s2
              %s167 = sphi [#allocation4], [#allocation4]
            $region113: #{stereo_pointmap_l1_loss.1} parent=109 // loop_header_branch
              %164 = sbr.rel (%p162) target = $region117
            $region114: #{stereo_pointmap_l1_loss.1} parent=109 // loop_body
              %v168 = vld [vmem:[%s166] sm:%s159]
              %169 = vst [vmem:[%s167] sm:%s159] %v168
              %v170 = vld [vmem:[%s166 + $0x2] sm:%s159]
              %171 = vst [vmem:[%s167 + $0x8] sm:%s159] %v170
            $region115: #{stereo_pointmap_l1_loss.1} parent=109 // loop_footer
              %s165 = sadd.s32 1, %s161
            $region116: #{stereo_pointmap_l1_loss.1} parent=109 // loop_footer_branch
              %160 = sbr.rel target = $region112
            $region117: #{stereo_pointmap_l1_loss.1} parent=109 // loop_exit
              _
          $region110: #{stereo_pointmap_l1_loss.1} parent=94 // pred_fallthru
            _
        $region95: #{stereo_pointmap_l1_loss.1} parent=90 // pred_fallthru
          _
        // Predicated region
        $region96: #{stereo_pointmap_l1_loss.1} parent=90 // pred_check
          _
        $region97: #{stereo_pointmap_l1_loss.1} parent=90 // pred_check_branch
          %141 = sbr.rel (0) target = $region99
        $region98: #{stereo_pointmap_l1_loss.1} parent=90 // pred_region
          %s143 = ssub.s32 4, 1
          loop: start=0, step=1, limit=1
          $region100: #{stereo_pointmap_l1_loss.1} parent=98 // loop_pre_header
            _
          $region101: #{stereo_pointmap_l1_loss.1} parent=98 // loop_header
            %s145 = sphi 0, %s149
            %p146 = scmp.ge.s32.totalorder %s145, 1
            %s150 = sphi %s2, %s2
            %s151 = sphi [#allocation4], [#allocation4]
          $region102: #{stereo_pointmap_l1_loss.1} parent=98 // loop_header_branch
            %148 = sbr.rel (%p146) target = $region106
          $region103: #{stereo_pointmap_l1_loss.1} parent=98 // loop_body
            %v152 = vld [vmem:[%s150] sm:%s143]
            %153 = vst [vmem:[%s151] sm:%s143] %v152
            %v154 = vld [vmem:[%s150 + $0x2] sm:%s143]
            %155 = vst [vmem:[%s151 + $0x8] sm:%s143] %v154
          $region104: #{stereo_pointmap_l1_loss.1} parent=98 // loop_footer
            %s149 = sadd.s32 1, %s145
          $region105: #{stereo_pointmap_l1_loss.1} parent=98 // loop_footer_branch
            %144 = sbr.rel target = $region101
          $region106: #{stereo_pointmap_l1_loss.1} parent=98 // loop_exit
            _
        $region99: #{stereo_pointmap_l1_loss.1} parent=90 // pred_fallthru
          _
      $region91: #{stereo_pointmap_l1_loss.1} parent=86 // pred_fallthru
        _
      %172 = vnop
    $region87: #{stereo_pointmap_l1_loss.1} parent=1 // pred_fallthru
      _
    // Predicated region
    $region118: #{stereo_pointmap_l1_loss.1} parent=1 // pred_check
      _
    $region119: #{stereo_pointmap_l1_loss.1} parent=1 // pred_check_branch
      %174 = sbr.rel (0) target = $region121
    $region120: #{stereo_pointmap_l1_loss.1} parent=1 // pred_region
      _
    $region121: #{stereo_pointmap_l1_loss.1} parent=1 // pred_fallthru
      _
    // Predicated region
    $region122: #{stereo_pointmap_l1_loss.1} parent=1 // pred_check
      _
    $region123: #{stereo_pointmap_l1_loss.1} parent=1 // pred_check_branch
      %176 = sbr.rel (0) target = $region125
    $region124: #{stereo_pointmap_l1_loss.1} parent=1 // pred_region
      _
    $region125: #{stereo_pointmap_l1_loss.1} parent=1 // pred_fallthru
      _
    // Predicated region
    $region126: #{stereo_pointmap_l1_loss.1} parent=1 // pred_check
      _
    $region127: #{stereo_pointmap_l1_loss.1} parent=1 // pred_check_branch
      %178 = sbr.rel (0) target = $region129
    $region128: #{stereo_pointmap_l1_loss.1} parent=1 // pred_region
      _
    $region129: #{stereo_pointmap_l1_loss.1} parent=1 // pred_fallthru
      _
    %v179 = vld [vmem:[#allocation2] sm:$0xff]
    %v180 = vld [vmem:[#allocation2 + $0x8] sm:$0xff]
    %v181 = vld [vmem:[#allocation2 + $0x10] sm:$0xff]
    %v182 = vld [vmem:[#allocation2 + $0x18] sm:$0xff]
    %v183 = vld [vmem:[#allocation2 + $0x20] sm:$0xff]
    %v184 = vld [vmem:[#allocation2 + $0x28] sm:$0xff]
    %v185 = vld [vmem:[#allocation3] sm:$0xff]
    %v186 = vld [vmem:[#allocation3 + $0x8] sm:$0xff]
    %v187 = vld [vmem:[#allocation3 + $0x10] sm:$0xff]
    %v188 = vld [vmem:[#allocation3 + $0x18] sm:$0xff]
    %v189 = vld [vmem:[#allocation3 + $0x20] sm:$0xff]
    %v190 = vld [vmem:[#allocation3 + $0x28] sm:$0xff]
    %v191 = vld [vmem:[#allocation4] sm:$0xff]
    %v192 = vld [vmem:[#allocation4 + $0x8] sm:$0xff]
    %vm193 = vcmp.gt.f32.partialorder %v185, -100.0
    %vm194 = vcmp.gt.f32.partialorder %v188, -100.0
    %v195 = vlaneseq
    %v196 = vshrl.u32 %v195, 7
    %s197 = smul.u32 0, 8
    %v198 = vstv %s197
    %v199 = vadd.s32 %v198, %v196
    %vm200 = vcmp.lt.s32.totalorder %v199, 2
    %v201 = vsel %vm200, 1, 0
    %vm202 = vcmp.eq.s32.totalorder %v201, 1
    %vm203 = vmand %vm193, %vm202
    %vm204 = vmand %vm194, %vm202
    %vm205 = vcmp.eq.f32.partialorder %v191, 100.0
    %vm206 = vcmp.eq.f32.partialorder %v192, 100.0
    %vm207 = vmand %vm203, %vm205
    %vm208 = vmand %vm204, %vm206
    %v209 = vsub.f32 %v179, %v185
    %v210 = vsub.f32 %v180, %v186
    %v211 = vsub.f32 %v181, %v187
    %v212 = vsub.f32 %v182, %v188
    %v213 = vsub.f32 %v183, %v189
    %v214 = vsub.f32 %v184, %v190
    %v215 = vand.u32 2147483647, %v209
    %v216 = vand.u32 2147483647, %v210
    %v217 = vand.u32 2147483647, %v211
    %v218 = vand.u32 2147483647, %v212
    %v219 = vand.u32 2147483647, %v213
    %v220 = vand.u32 2147483647, %v214
    %v221 = vadd.f32 %v215, %v216
    %v222 = vadd.f32 %v221, %v217
    %v223 = vadd.f32 %v218, %v219
    %v224 = vadd.f32 %v223, %v220
    %v225 = vsel %vm203, %v222, 0.0
    %v226 = vsel %vm204, %v224, 0.0
    %v227 = vsel %vm207, %v222, 0.0
    %v228 = vsel %vm208, %v224, 0.0
    %v229 = vadd.f32 %v225, %v226
    %v230 = vrot.slane %v229, 4
    %v231 = vadd.f32 %v229, %v230
    %v232 = vrot.slane %v231, 2
    %v233 = vadd.f32 %v231, %v232
    %v234 = vrot.slane %v233, 1
    %v235 = vadd.f32 %v233, %v234
    %236 = vst [vmem:[%s3] sm:$0x1] %v235
    %v237 = vsel %vm203, 1, 0
    %v238 = vsel %vm204, 1, 0
    %v239 = vcvt.s32.f32 %v237
    %v240 = vcvt.s32.f32 %v238
    %v241 = vadd.f32 %v239, %v240
    %v242 = vrot.slane %v241, 4
    %v243 = vadd.f32 %v241, %v242
    %v244 = vrot.slane %v243, 2
    %v245 = vadd.f32 %v243, %v244
    %v246 = vrot.slane %v245, 1
    %v247 = vadd.f32 %v245, %v246
    %248 = vst [vmem:[%s3 + $0x1] sm:$0x1] %v247
    %v249 = vadd.f32 %v227, %v228
    %v250 = vrot.slane %v249, 4
    %v251 = vadd.f32 %v249, %v250
    %v252 = vrot.slane %v251, 2
    %v253 = vadd.f32 %v251, %v252
    %v254 = vrot.slane %v253, 1
    %v255 = vadd.f32 %v253, %v254
    %256 = vst [vmem:[%s3 + $0x2] sm:$0x1] %v255
    %v257 = vsel %vm207, 1, 0
    %v258 = vsel %vm208, 1, 0
    %v259 = vcvt.s32.f32 %v257
    %v260 = vcvt.s32.f32 %v258
    %v261 = vadd.f32 %v259, %v260
    %v262 = vrot.slane %v261, 4
    %v263 = vadd.f32 %v261, %v262
    %v264 = vrot.slane %v263, 2
    %v265 = vadd.f32 %v263, %v264
    %v266 = vrot.slane %v265, 1
    %v267 = vadd.f32 %v265, %v266
    %268 = vst [vmem:[%s3 + $0x3] sm:$0x1] %v267
    // Predicated region
    $region130: #{stereo_pointmap_l1_loss.1} parent=1 // pred_check
      _
    $region131: #{stereo_pointmap_l1_loss.1} parent=1 // pred_check_branch
      %270 = sbr.rel (0) target = $region133
    $region132: #{stereo_pointmap_l1_loss.1} parent=1 // pred_region
      _
    $region133: #{stereo_pointmap_l1_loss.1} parent=1 // pred_fallthru
      _
    // Predicated region
    $region134: #{stereo_pointmap_l1_loss.1} parent=1 // pred_check
      _
    $region135: #{stereo_pointmap_l1_loss.1} parent=1 // pred_check_branch
      %272 = sbr.rel (0) target = $region137
    $region136: #{stereo_pointmap_l1_loss.1} parent=1 // pred_region
      _
    $region137: #{stereo_pointmap_l1_loss.1} parent=1 // pred_fallthru
      _

</llo_original>
